<compile_context>
chip_gen: v7x
topology: tpu7x:2x2x1
jax: 0.10.0
libtpu: 0.0.40
codegen_flags: <defaults>
</compile_context>

<pallas_src>
import jax
import jax.numpy as jnp
from jax.experimental import pallas as pl
from jax.experimental.pallas import tpu as pltpu

N_EMBED = 384
EPS = 1e-5


def layernorm1d_kernel(x_ref, gamma_ref, beta_ref, o_ref):
    # x_ref: (TB, D) tile; gamma/beta: (1, D) f32, VMEM-resident constants.
    x = x_ref[...].astype(jnp.float32)
    d = x.shape[1]
    # Fused one-pass statistics: single sweep over the tile.
    s1 = jnp.sum(x, axis=1, keepdims=True)
    s2 = jnp.sum(x * x, axis=1, keepdims=True)
    mean = s1 * (1.0 / d)
    # Unbiased variance (divide by D-1), matching torch.var default.
    var = (s2 - s1 * mean) / (d - 1)
    inv_std = jax.lax.rsqrt(var + EPS)           # rsqrt -> EUP slot (free-ish)
    y = (x - mean) * inv_std * gamma_ref[...] + beta_ref[...]
    o_ref[...] = y.astype(o_ref.dtype)


def _round_up(n, m):
    return ((n + m - 1) // m) * m


def _tpu_config():
    """(default block_b, TensorCores per chip) by TPU generation."""
    try:
        kind = jax.devices()[0].device_kind.lower()
    except Exception:
        kind = ""
    if "v5 lite" in kind or "v5e" in kind or "v5lite" in kind:
        return 512, 1          # v5e: 16 MiB default scoped VMEM -> smaller tile
    if "v7" in kind:
        return 2048, 2         # v7x: 3.2 TB/s HBM, 2 TCs -> bigger tile, even split
    if "v6" in kind:
        return 1024, 1
    return 1024, 1             # unknown: conservative defaults


def layernorm1d(x, gamma, beta, *, block_b=None):
    """x: (B, D), gamma/beta: (D,). Normalizes over dim 1 (feature axis)."""
    B, D = x.shape
    assert D == gamma.shape[0] == beta.shape[0]

    default_bb, num_cores = _tpu_config()
    if block_b is None:
        block_b = default_bb

    # Packed-sublane quantum for the input dtype: 8 (f32), 16 (bf16), 32 (int8).
    itemsize = jnp.dtype(x.dtype).itemsize
    sublane = 8 * max(1, 4 // itemsize)

    # Batch tile: big for bandwidth, capped for small B. No padding of x: the
    # ragged edge block is handled by Pallas (rows are independent, so the
    # undefined rows in the edge tile never affect real rows and their output
    # writes are dropped).
    bb = min(block_b, _round_up(B, sublane))
    bb = max(bb, sublane)

    # Multi-TensorCore chips only (v7x): make the step count a multiple of the
    # core count so the "parallel" batch axis shards evenly across cores.
    if num_cores > 1 and B > num_cores * sublane:
        steps = pl.cdiv(B, bb)
        if steps % num_cores != 0:
            target_steps = _round_up(steps, num_cores)
            bb = max(sublane, _round_up(pl.cdiv(B, target_steps), sublane))

    # Hoisted one-time cast; (1, D) so they broadcast over the row tile.
    gamma2 = gamma.reshape(1, D).astype(jnp.float32)
    beta2 = beta.reshape(1, D).astype(jnp.float32)

    grid = (pl.cdiv(B, bb),)
    out = pl.pallas_call(
        layernorm1d_kernel,
        out_shape=jax.ShapeDtypeStruct((B, D), x.dtype),
        grid_spec=pltpu.PrefetchScalarGridSpec(
            num_scalar_prefetch=0,
            grid=grid,
            in_specs=[
                pl.BlockSpec((bb, D), lambda i: (i, 0)),
                # gamma/beta: whole-array VMEM residents (1.5 KiB each), no
                # per-step pipelining or DMA.
                pl.BlockSpec(memory_space=pltpu.MemorySpace.VMEM),
                pl.BlockSpec(memory_space=pltpu.MemorySpace.VMEM),
            ],
            out_specs=pl.BlockSpec((bb, D), lambda i: (i, 0)),
        ),
        compiler_params=pltpu.CompilerParams(
            dimension_semantics=("parallel",),
        ),
    )(x, gamma2, beta2)

    return out


def layernorm1d_ref(x, gamma, beta):
    """Pure-JAX reference mirroring the PyTorch forward exactly."""
    x32 = x.astype(jnp.float32)
    mean = jnp.mean(x32, axis=1, keepdims=True)
    var = jnp.var(x32, axis=1, keepdims=True, ddof=1)  # unbiased, like torch.var
    x_hat = (x32 - mean) / jnp.sqrt(var + EPS)
    return (gamma * x_hat + beta).astype(x.dtype)


if __name__ == "__main__":
    key = jax.random.PRNGKey(0)
    kx, kg, kb = jax.random.split(key, 3)

    # Small demo shape; B=24 exercises a ragged / non-power-of-two batch.
    B = 24
    x = jax.random.normal(kx, (B, N_EMBED), dtype=jnp.float32)

    # Parameter init matching nn.Parameter(torch.ones/zeros(n_embed)).
    gamma = jnp.ones((N_EMBED,), dtype=jnp.float32)
    beta = jnp.zeros((N_EMBED,), dtype=jnp.float32)

    out = layernorm1d(x, gamma, beta)
    out = jax.block_until_ready(out)
    ref = layernorm1d_ref(x, gamma, beta)
    assert out.shape == (B, N_EMBED)
    assert jnp.allclose(out, ref, atol=1e-5, rtol=1e-5), "mismatch vs reference"

    # Also check the affine path with non-trivial (trained-like) gamma/beta,
    # and a ragged batch that forces a partial edge block.
    gamma2 = jax.random.normal(kg, (N_EMBED,), dtype=jnp.float32)
    beta2 = jax.random.normal(kb, (N_EMBED,), dtype=jnp.float32)
    out2 = jax.block_until_ready(layernorm1d(x, gamma2, beta2))
    ref2 = layernorm1d_ref(x, gamma2, beta2)
    assert jnp.allclose(out2, ref2, atol=1e-5, rtol=1e-5), "mismatch (affine) vs reference"

    B3 = 19  # not a multiple of the sublane quantum -> ragged edge block
    x3 = jax.random.normal(kb, (B3, N_EMBED), dtype=jnp.float32)
    out3 = jax.block_until_ready(layernorm1d(x3, gamma2, beta2))
    ref3 = layernorm1d_ref(x3, gamma2, beta2)
    assert out3.shape == (B3, N_EMBED)
    assert jnp.allclose(out3, ref3, atol=1e-5, rtol=1e-5), "mismatch (ragged) vs reference"

    print("KERNEL_OK")
</pallas_src>

<mosaic_0001>
module attributes {stable_mosaic.version = 11 : i64} {
  func.func @layernorm1d_kernel(%arg0: i32, %arg1: memref<24x384xf32, #tpu.memory_space<vmem>>, %arg2: memref<1x384xf32, #tpu.memory_space<vmem>>, %arg3: memref<1x384xf32, #tpu.memory_space<vmem>>, %arg4: memref<24x384xf32, #tpu.memory_space<vmem>>) attributes {dimension_semantics = [#tpu.dimension_semantics<parallel>], iteration_bounds = array<i64: 1>, scalar_prefetch = 0 : i64, scratch_operands = 0 : i64, tpu.core_type = #tpu.core_type<tc>, window_params = [{transform_indices = @transform_0, window_bounds = array<i64: 24, 384>}, {pipeline_mode = #tpu.pipeline_mode<synchronous>, transform_indices = @transform_1, window_bounds = array<i64: 1, 384>}, {pipeline_mode = #tpu.pipeline_mode<synchronous>, transform_indices = @transform_2, window_bounds = array<i64: 1, 384>}, {transform_indices = @transform_3, window_bounds = array<i64: 24, 384>}]} {
    %c0 = arith.constant 0 : index
    %c0_0 = arith.constant 0 : index
    %0 = vector.load %arg1[%c0, %c0_0] : memref<24x384xf32, #tpu.memory_space<vmem>>, vector<24x384xf32>
    %cst = arith.constant dense<0.000000e+00> : vector<24xf32>
    %1 = vector.multi_reduction <add>, %0, %cst [1] : vector<24x384xf32> to vector<24xf32>
    %2 = vector.shape_cast %1 : vector<24xf32> to vector<24x1xf32>
    %3 = arith.mulf %0, %0 : vector<24x384xf32>
    %cst_1 = arith.constant dense<0.000000e+00> : vector<24xf32>
    %4 = vector.multi_reduction <add>, %3, %cst_1 [1] : vector<24x384xf32> to vector<24xf32>
    %5 = vector.shape_cast %4 : vector<24xf32> to vector<24x1xf32>
    %cst_2 = arith.constant 0.00260416674 : f32
    %6 = vector.broadcast %cst_2 : f32 to vector<24x1xf32>
    %7 = arith.mulf %2, %6 : vector<24x1xf32>
    %8 = arith.mulf %2, %7 : vector<24x1xf32>
    %9 = arith.subf %5, %8 : vector<24x1xf32>
    %cst_3 = arith.constant 3.830000e+02 : f32
    %10 = vector.broadcast %cst_3 : f32 to vector<24x1xf32>
    %11 = arith.divf %9, %10 : vector<24x1xf32>
    %cst_4 = arith.constant 9.99999974E-6 : f32
    %12 = vector.broadcast %cst_4 : f32 to vector<24x1xf32>
    %13 = arith.addf %11, %12 : vector<24x1xf32>
    %14 = math.rsqrt %13 : vector<24x1xf32>
    %15 = vector.broadcast %7 : vector<24x1xf32> to vector<24x384xf32>
    %16 = arith.subf %0, %15 : vector<24x384xf32>
    %17 = vector.broadcast %14 : vector<24x1xf32> to vector<24x384xf32>
    %18 = arith.mulf %16, %17 : vector<24x384xf32>
    %c0_5 = arith.constant 0 : index
    %c0_6 = arith.constant 0 : index
    %19 = vector.load %arg2[%c0_5, %c0_6] : memref<1x384xf32, #tpu.memory_space<vmem>>, vector<1x384xf32>
    %20 = vector.broadcast %19 : vector<1x384xf32> to vector<24x384xf32>
    %21 = arith.mulf %18, %20 : vector<24x384xf32>
    %c0_7 = arith.constant 0 : index
    %c0_8 = arith.constant 0 : index
    %22 = vector.load %arg3[%c0_7, %c0_8] : memref<1x384xf32, #tpu.memory_space<vmem>>, vector<1x384xf32>
    %23 = vector.broadcast %22 : vector<1x384xf32> to vector<24x384xf32>
    %24 = arith.addf %21, %23 : vector<24x384xf32>
    %c0_9 = arith.constant 0 : index
    %c0_10 = arith.constant 0 : index
    %25 = vector.load %arg4[%c0_9, %c0_10] : memref<24x384xf32, #tpu.memory_space<vmem>>, vector<24x384xf32>
    tpu.vector_store %arg4[%c0_9, %c0_10], %24 {strides = array<i32>} : memref<24x384xf32, #tpu.memory_space<vmem>>, vector<24x384xf32>,
    return
  }
  func.func @transform_0(%arg0: i32) -> (i32, i32) {
    %c0_i32 = arith.constant 0 : i32
    %c0_i32_0 = arith.constant 0 : i32
    return %arg0, %c0_i32 : i32, i32
  }
  func.func @transform_1(%arg0: i32) -> (i32, i32) {
    %c0_i32 = arith.constant 0 : i32
    %c0_i32_0 = arith.constant 0 : i32
    %c0_i32_1 = arith.constant 0 : i32
    return %c0_i32, %c0_i32_0 : i32, i32
  }
  func.func @transform_2(%arg0: i32) -> (i32, i32) {
    %c0_i32 = arith.constant 0 : i32
    %c0_i32_0 = arith.constant 0 : i32
    %c0_i32_1 = arith.constant 0 : i32
    return %c0_i32, %c0_i32_0 : i32, i32
  }
  func.func @transform_3(%arg0: i32) -> (i32, i32) {
    %c0_i32 = arith.constant 0 : i32
    %c0_i32_0 = arith.constant 0 : i32
    return %arg0, %c0_i32 : i32, i32
  }
}

</mosaic_0001>

<llo_original>
// kernel: tpu_custom_call.1
$region0: #{tpu_custom_call.1}
  #allocation0 [shape = 'u32[]', space=smem, size = 0x4, offset = 0x4, fixed_abs, tag = 'smem constant byte address 0x4 - core index']
  #allocation1 [shape = 'u32[144,128]{1,0:T(1,128)}', space=vmem, size = 0x12000, scoped, tag = 'internal scratch']
  %s0 = inlined_call_operand.hbm [shape: f32[24,384], index: 0, kind: input, shape index: {}]
  %s1 = inlined_call_operand.vmem [shape: f32[1,384], index: 1, kind: input, shape index: {}]
  %s2 = inlined_call_operand.vmem [shape: f32[1,384], index: 2, kind: input, shape index: {}]
  %s3 = inlined_call_operand.hbm [shape: f32[24,384], index: 3, kind: output, shape index: {}]
  %s4 = sld [smem:[#allocation0]]
  $region26: #{tpu_custom_call.1} parent=0
    _
  %s6 = ssub.s32 1, %s4
  %s7 = scalar_select 0, %s6, %s4
  $region1: #{tpu_custom_call.1} parent=0
    #allocation2 [shape = 'u8[36864]{0}', space=vmem, size = 0x9000, scoped, tag = 'input window, operand 0, single buffered']
    #allocation3 [shape = 's32[1]{0}', space=sflag, size = 0x4, scoped, tag = 'scoped memory for tpu_custom_call.1']
    #allocation4 [shape = 's32[1]{0}', space=sflag, size = 0x4, scoped, tag = 'scoped memory for tpu_custom_call.1']
    #allocation5 [shape = 'u8[36864]{0}', space=vmem, size = 0x9000, scoped, tag = 'output window, operand 0, single buffered']
    %8 = vsyncpa [#allocation3], 0
    %9 = vsyncpa [#allocation4], 0
    // Predicated region
    $region2: #{tpu_custom_call.1} parent=1 // pred_check
      _
    $region3: #{tpu_custom_call.1} parent=1 // pred_check_branch
      %11 = sbr.rel (0) target = $region5
    $region4: #{tpu_custom_call.1} parent=1 // pred_region
      %s13 = ssub.s32 1152, 1152
      %14 = vsyncadd [#allocation3], %s13
      %s15 = sshll.u32 [#allocation2], 4
      %s16 = int_to_ptr.vmem [resolvable:$true] %s15
      %21 = dma.hbm_to_vmem [thread:$0]  %s0, 1152, %s16, [#allocation3], 384, 384, 24
    $region5: #{tpu_custom_call.1} parent=1 // pred_fallthru
      _
    // Predicated region
    $region6: #{tpu_custom_call.1} parent=1 // pred_check
      _
    $region7: #{tpu_custom_call.1} parent=1 // pred_check_branch
      %23 = sbr.rel (0) target = $region9
    $region8: #{tpu_custom_call.1} parent=1 // pred_region
      _
    $region9: #{tpu_custom_call.1} parent=1 // pred_fallthru
      _
    // Predicated region
    $region10: #{tpu_custom_call.1} parent=1 // pred_check
      _
    $region11: #{tpu_custom_call.1} parent=1 // pred_check_branch
      %25 = sbr.rel (0) target = $region13
    $region12: #{tpu_custom_call.1} parent=1 // pred_region
      _
    $region13: #{tpu_custom_call.1} parent=1 // pred_fallthru
      _
    // Predicated region
    $region14: #{tpu_custom_call.1} parent=1 // pred_check
      _
    $region15: #{tpu_custom_call.1} parent=1 // pred_check_branch
      %27 = sbr.rel (0) target = $region17
    $region16: #{tpu_custom_call.1} parent=1 // pred_region
      %28 = dma.done [#allocation3], 1152
    $region17: #{tpu_custom_call.1} parent=1 // pred_fallthru
      _
    %v29 = vld [vmem:[#allocation2] sm:$0xff]
    %v30 = vld [vmem:[#allocation2 + $0x8] sm:$0xff]
    %v31 = vld [vmem:[#allocation2 + $0x10] sm:$0xff]
    %v32 = vld [vmem:[#allocation2 + $0x18] sm:$0xff]
    %v33 = vld [vmem:[#allocation2 + $0x20] sm:$0xff]
    %v34 = vld [vmem:[#allocation2 + $0x28] sm:$0xff]
    %v35 = vld [vmem:[#allocation2 + $0x30] sm:$0xff]
    %v36 = vld [vmem:[#allocation2 + $0x38] sm:$0xff]
    %v37 = vld [vmem:[#allocation2 + $0x40] sm:$0xff]
    %v38 = vadd.f32 %v29, %v30
    %v39 = vadd.f32 %v38, %v31
    %40 = vadd.xlane.f32.xlu0 %v39
    %v41 = vpop.xlane.xlu0 %40
    %v42 = vadd.f32 %v32, %v33
    %v43 = vadd.f32 %v42, %v34
    %44 = vadd.xlane.f32.xlu0 %v43
    %v45 = vpop.xlane.xlu0 %44
    %v46 = vadd.f32 %v35, %v36
    %v47 = vadd.f32 %v46, %v37
    %48 = vadd.xlane.f32.xlu0 %v47
    %v49 = vpop.xlane.xlu0 %48
    %v50 = vmul.f32 %v29, %v29
    %v51 = vmul.f32 %v30, %v30
    %v52 = vmul.f32 %v31, %v31
    %v53 = vmul.f32 %v32, %v32
    %v54 = vmul.f32 %v33, %v33
    %v55 = vmul.f32 %v34, %v34
    %v56 = vmul.f32 %v35, %v35
    %v57 = vmul.f32 %v36, %v36
    %v58 = vmul.f32 %v37, %v37
    %v59 = vadd.f32 %v50, %v51
    %v60 = vadd.f32 %v59, %v52
    %61 = vadd.xlane.f32.xlu0 %v60
    %v62 = vpop.xlane.xlu0 %61
    %v63 = vadd.f32 %v53, %v54
    %v64 = vadd.f32 %v63, %v55
    %65 = vadd.xlane.f32.xlu0 %v64
    %v66 = vpop.xlane.xlu0 %65
    %v67 = vadd.f32 %v56, %v57
    %v68 = vadd.f32 %v67, %v58
    %69 = vadd.xlane.f32.xlu0 %v68
    %v70 = vpop.xlane.xlu0 %69
    %v71 = vmul.f32 %v41, 0.0026041667
    %v72 = vmul.f32 %v45, 0.0026041667
    %v73 = vmul.f32 %v49, 0.0026041667
    %v74 = vmul.f32 %v41, %v71
    %v75 = vmul.f32 %v45, %v72
    %v76 = vmul.f32 %v49, %v73
    %v77 = vsub.f32 %v62, %v74
    %v78 = vsub.f32 %v66, %v75
    %v79 = vsub.f32 %v70, %v76
    %v80 = vrcp.pop 383.0
    %v81 = vmul.f32 %v77, %v80
    %v82 = vmul.f32 %v78, %v80
    %v83 = vmul.f32 %v79, %v80
    %v84 = vadd.f32 %v81, 1e-05
    %v85 = vadd.f32 %v82, 1e-05
    %v86 = vadd.f32 %v83, 1e-05
    %v87 = vrsqrt.pop %v84
    %v88 = vrsqrt.pop %v85
    %v89 = vrsqrt.pop %v86
    %v90 = vsub.f32 %v29, %v71
    %v91 = vsub.f32 %v30, %v71
    %v92 = vsub.f32 %v31, %v71
    %v93 = vsub.f32 %v32, %v72
    %v94 = vsub.f32 %v33, %v72
    %v95 = vsub.f32 %v34, %v72
    %v96 = vsub.f32 %v35, %v73
    %v97 = vsub.f32 %v36, %v73
    %v98 = vsub.f32 %v37, %v73
    %v99 = vmul.f32 %v90, %v87
    %v100 = vmul.f32 %v91, %v87
    %v101 = vmul.f32 %v92, %v87
    %v102 = vmul.f32 %v93, %v88
    %v103 = vmul.f32 %v94, %v88
    %v104 = vmul.f32 %v95, %v88
    %v105 = vmul.f32 %v96, %v89
    %v106 = vmul.f32 %v97, %v89
    %v107 = vmul.f32 %v98, %v89
    %v108 = vld [vmem:[%s1] sm:$0x7]
    %v110 = vlaneseq
    %v111 = vshrl.u32 %v110, 7
    %v112 = vsub.s32 0, %v111
    %v113 = vrot.slane %v108, %v112
    %v114 = vlaneseq
    %v115 = vshrl.u32 %v114, 7
    %v116 = vsub.s32 1, %v115
    %v117 = vrot.slane %v108, %v116
    %v118 = vlaneseq
    %v119 = vshrl.u32 %v118, 7
    %v120 = vsub.s32 2, %v119
    %v121 = vrot.slane %v108, %v120
    %v125 = vmul.f32 %v99, %v113
    %v126 = vmul.f32 %v100, %v117
    %v127 = vmul.f32 %v101, %v121
    %v128 = vmul.f32 %v102, %v113
    %v129 = vmul.f32 %v103, %v117
    %v130 = vmul.f32 %v104, %v121
    %v131 = vmul.f32 %v105, %v113
    %v132 = vmul.f32 %v106, %v117
    %v133 = vmul.f32 %v107, %v121
    %v134 = vld [vmem:[%s2] sm:$0x7]
    %v136 = vlaneseq
    %v137 = vshrl.u32 %v136, 7
    %v138 = vsub.s32 0, %v137
    %v139 = vrot.slane %v134, %v138
    %v140 = vlaneseq
    %v141 = vshrl.u32 %v140, 7
    %v142 = vsub.s32 1, %v141
    %v143 = vrot.slane %v134, %v142
    %v144 = vlaneseq
    %v145 = vshrl.u32 %v144, 7
    %v146 = vsub.s32 2, %v145
    %v147 = vrot.slane %v134, %v146
    %v151 = vadd.f32 %v125, %v139
    %v152 = vadd.f32 %v126, %v143
    %v153 = vadd.f32 %v127, %v147
    %v154 = vadd.f32 %v128, %v139
    %v155 = vadd.f32 %v129, %v143
    %v156 = vadd.f32 %v130, %v147
    %v157 = vadd.f32 %v131, %v139
    %v158 = vadd.f32 %v132, %v143
    %v159 = vadd.f32 %v133, %v147
    %160 = vst [vmem:[#allocation5] sm:$0xff] %v151
    %161 = vst [vmem:[#allocation5 + $0x8] sm:$0xff] %v152
    %162 = vst [vmem:[#allocation5 + $0x10] sm:$0xff] %v153
    %163 = vst [vmem:[#allocation5 + $0x18] sm:$0xff] %v154
    %164 = vst [vmem:[#allocation5 + $0x20] sm:$0xff] %v155
    %165 = vst [vmem:[#allocation5 + $0x28] sm:$0xff] %v156
    %166 = vst [vmem:[#allocation5 + $0x30] sm:$0xff] %v157
    %167 = vst [vmem:[#allocation5 + $0x38] sm:$0xff] %v158
    %168 = vst [vmem:[#allocation5 + $0x40] sm:$0xff] %v159
    // Predicated region
    $region18: #{tpu_custom_call.1} parent=1 // pred_check
      _
    $region19: #{tpu_custom_call.1} parent=1 // pred_check_branch
      %170 = sbr.rel (0) target = $region21
    $region20: #{tpu_custom_call.1} parent=1 // pred_region
      %s172 = ssub.s32 1152, 1152
      %173 = vsyncadd [#allocation4], %s172
      %s174 = sshll.u32 [#allocation5], 4
      %s175 = int_to_ptr.vmem [resolvable:$true] %s174
      %180 = dma.vmem_to_hbm [thread:$0]  %s175, 1152, %s3, [#allocation4], 384, 384, 24
    $region21: #{tpu_custom_call.1} parent=1 // pred_fallthru
      _
    // Predicated region
    $region22: #{tpu_custom_call.1} parent=1 // pred_check
      _
    $region23: #{tpu_custom_call.1} parent=1 // pred_check_branch
      %182 = sbr.rel (0) target = $region25
    $region24: #{tpu_custom_call.1} parent=1 // pred_region
      %183 = dma.done [#allocation4], 1152
    $region25: #{tpu_custom_call.1} parent=1 // pred_fallthru
      _
    %184 = vsyncpa [#allocation3], 1
    %185 = vsyncpa [#allocation4], 1

</llo_original>
